<compile_context>
chip_gen: v7x
topology: tpu7x:2x2x1
jax: 0.10.0
libtpu: 0.0.40
codegen_flags: <defaults>
</compile_context>

<pallas_src>
import jax
import jax.numpy as jnp
from jax.experimental import pallas as pl
from jax.experimental.pallas import tpu as pltpu

_EPS = 1e-05
_SMALL_BATCH_THRESHOLD = 4096   # below this, plain XLA beats a custom-call launch


def _scale_kernel(c_ref, x_ref, o_ref):
    """c_ref: (4,) f32 SMEM = [c_lin-eps, c_ang-eps, c_lin^2, c_ang^2].
    x_ref / o_ref: (6, TB) f32 VMEM; rows 0-2 linear, rows 3-5 angular."""
    x = x_ref[...]                                        # (6, TB)
    x2 = x * x

    # Per-sample squared norms as static sublane-row sums (lane-parallel VPU work).
    sq_lin = x2[0:1, :] + x2[1:2, :] + x2[2:3, :]         # (1, TB)
    sq_ang = x2[3:4, :] + x2[4:5, :] + x2[5:6, :]         # (1, TB)

    # norm > c  <=>  sq > c^2 for non-negative c; one EUP rsqrt replaces
    # sqrt + divide.  max() keeps the not-taken branch finite.
    inv_lin = jax.lax.rsqrt(jnp.maximum(sq_lin, 1e-30))
    inv_ang = jax.lax.rsqrt(jnp.maximum(sq_ang, 1e-30))
    f_lin = jnp.where(sq_lin > c_ref[2], c_ref[0] * inv_lin, 1.0)   # (1, TB)
    f_ang = jnp.where(sq_ang > c_ref[3], c_ref[1] * inv_ang, 1.0)   # (1, TB)

    # Single full-tile (unmasked) store: select per sublane-row between factors.
    row = jax.lax.broadcasted_iota(jnp.int32, x.shape, 0)            # 0..5
    f = jnp.where(row < 3,
                  jnp.broadcast_to(f_lin, x.shape),
                  jnp.broadcast_to(f_ang, x.shape))
    o_ref[...] = x * f


def _round_up(n, m):
    return ((n + m - 1) // m) * m


def _scale_jax(x, c_lin, c_ang):
    """Pure-JAX formula mirroring the PyTorch forward (vectorized over rows)."""
    lin, ang = x[..., :3], x[..., 3:]
    ln = jnp.linalg.norm(lin, axis=-1, keepdims=True)
    an = jnp.linalg.norm(ang, axis=-1, keepdims=True)
    lin = jnp.where(ln > c_lin, (c_lin - _EPS) / jnp.maximum(ln, 1e-30) * lin, lin)
    ang = jnp.where(an > c_ang, (c_ang - _EPS) / jnp.maximum(an, 1e-30) * ang, ang)
    return jnp.concatenate([lin, ang], axis=-1)


def scale_forward(x, constraint_linear, constraint_angle, *,
                  block_lanes=32768, use_pallas=None):
    """Batched Scale.forward: x is (B, 6) or (6,); returns the same shape (f32)."""
    x = jnp.asarray(x, jnp.float32)
    single = x.ndim == 1
    if single:
        x = x[None, :]
    assert x.ndim == 2 and x.shape[1] == 6, "Scale expects (..., 6) action vectors"
    b = x.shape[0]

    if use_pallas is None:
        use_pallas = b >= _SMALL_BATCH_THRESHOLD
    if not use_pallas:
        out = _scale_jax(x, constraint_linear, constraint_angle)
        return out[0] if single else out

    # Pre-folded constraint scalars (SMEM): [c_lin-eps, c_ang-eps, c_lin^2, c_ang^2].
    c = jnp.array(
        [constraint_linear - _EPS, constraint_angle - _EPS,
         constraint_linear * constraint_linear,
         constraint_angle * constraint_angle],
        dtype=jnp.float32)

    # Block sizing: lane-aligned (multiple of 128), large blocks, grid >= 2 when
    # there is enough work so both v7x TensorCores get a share of the batch.
    b128 = _round_up(b, 128)
    n_blocks = pl.cdiv(b128, block_lanes)
    if b128 >= 256:
        n_blocks = max(n_blocks, 2)
    tb = _round_up(pl.cdiv(b128, n_blocks), 128)
    b_pad = n_blocks * tb

    # Lane-dense layout: samples along lanes.  Zero-padded columns give zero
    # norms -> factor 1 -> zero outputs, sliced off below.
    xt = x.T                                              # (6, B)
    if b_pad != b:
        xt = jnp.pad(xt, ((0, 0), (0, b_pad - b)))

    out_t = pl.pallas_call(
        _scale_kernel,
        out_shape=jax.ShapeDtypeStruct((6, b_pad), jnp.float32),
        grid=(n_blocks,),
        in_specs=[
            pl.BlockSpec(memory_space=pltpu.MemorySpace.SMEM),   # constraint scalars
            pl.BlockSpec((6, tb), lambda i: (0, i)),             # lane-dense action tile
        ],
        out_specs=pl.BlockSpec((6, tb), lambda i: (0, i)),
        compiler_params=pltpu.CompilerParams(
            dimension_semantics=("parallel",),   # split batch across v7x TCs
        ),
    )(c, xt)

    out = out_t[:, :b].T
    return out[0] if single else out


if __name__ == "__main__":
    # "Parameters" of the module are just two scalar constraints.
    constraint_linear = 0.5
    constraint_angle = 1.0

    key = jax.random.PRNGKey(0)

    # Small batch of 6-dim actions (several norms exceed the limits).  Force the
    # Pallas path so the kernel itself is exercised at this small test size.
    x = jax.random.normal(key, (16, 6), dtype=jnp.float32) * 2.0
    out = scale_forward(x, constraint_linear, constraint_angle, use_pallas=True)
    out = jax.block_until_ready(out)
    ref = _scale_jax(x, constraint_linear, constraint_angle)
    assert out.shape == (16, 6)
    assert jnp.allclose(out, ref, atol=1e-5, rtol=1e-5), (out, ref)

    # Slightly larger batch: exercises the multi-block (grid >= 2) path.
    x2 = jax.random.normal(jax.random.PRNGKey(1), (200, 6), dtype=jnp.float32) * 2.0
    out2 = scale_forward(x2, constraint_linear, constraint_angle, use_pallas=True)
    out2 = jax.block_until_ready(out2)
    ref2 = _scale_jax(x2, constraint_linear, constraint_angle)
    assert out2.shape == (200, 6)
    assert jnp.allclose(out2, ref2, atol=1e-5, rtol=1e-5), (out2, ref2)

    # Single action vector (the exact shape the original torch forward handles);
    # goes through the small-input pure-JAX fast path.
    out1 = jax.block_until_ready(scale_forward(x[0], constraint_linear, constraint_angle))
    assert out1.shape == (6,)
    assert jnp.allclose(out1, ref[0], atol=1e-5, rtol=1e-5), (out1, ref[0])

    print("KERNEL_OK")
</pallas_src>

<mosaic_0001>
module attributes {stable_mosaic.version = 11 : i64} {
  func.func @_scale_kernel(%arg0: i32, %arg1: memref<4xf32, #tpu.memory_space<smem>>, %arg2: memref<6x128xf32, #tpu.memory_space<vmem>>, %arg3: memref<6x128xf32, #tpu.memory_space<vmem>>) attributes {dimension_semantics = [#tpu.dimension_semantics<parallel>], iteration_bounds = array<i64: 1>, scalar_prefetch = 0 : i64, scratch_operands = 0 : i64, tpu.core_type = #tpu.core_type<tc>, window_params = [{transform_indices = @transform_0, window_bounds = array<i64: 4>}, {transform_indices = @transform_1, window_bounds = array<i64: 6, 128>}, {transform_indices = @transform_2, window_bounds = array<i64: 6, 128>}]} {
    %c0 = arith.constant 0 : index
    %c0_0 = arith.constant 0 : index
    %0 = vector.load %arg2[%c0, %c0_0] : memref<6x128xf32, #tpu.memory_space<vmem>>, vector<6x128xf32>
    %1 = arith.mulf %0, %0 : vector<6x128xf32>
    %2 = vector.extract_strided_slice %1 {offsets = [0, 0], sizes = [1, 128], strides = [1, 1]} : vector<6x128xf32> to vector<1x128xf32>
    %3 = vector.extract_strided_slice %1 {offsets = [1, 0], sizes = [1, 128], strides = [1, 1]} : vector<6x128xf32> to vector<1x128xf32>
    %4 = arith.addf %2, %3 : vector<1x128xf32>
    %5 = vector.extract_strided_slice %1 {offsets = [2, 0], sizes = [1, 128], strides = [1, 1]} : vector<6x128xf32> to vector<1x128xf32>
    %6 = arith.addf %4, %5 : vector<1x128xf32>
    %7 = vector.extract_strided_slice %1 {offsets = [3, 0], sizes = [1, 128], strides = [1, 1]} : vector<6x128xf32> to vector<1x128xf32>
    %8 = vector.extract_strided_slice %1 {offsets = [4, 0], sizes = [1, 128], strides = [1, 1]} : vector<6x128xf32> to vector<1x128xf32>
    %9 = arith.addf %7, %8 : vector<1x128xf32>
    %10 = vector.extract_strided_slice %1 {offsets = [5, 0], sizes = [1, 128], strides = [1, 1]} : vector<6x128xf32> to vector<1x128xf32>
    %11 = arith.addf %9, %10 : vector<1x128xf32>
    %cst = arith.constant 1.000000e-30 : f32
    %12 = vector.broadcast %cst : f32 to vector<1x128xf32>
    %13 = arith.maximumf %6, %12 : vector<1x128xf32>
    %14 = math.rsqrt %13 : vector<1x128xf32>
    %cst_1 = arith.constant 1.000000e-30 : f32
    %15 = vector.broadcast %cst_1 : f32 to vector<1x128xf32>
    %16 = arith.maximumf %11, %15 : vector<1x128xf32>
    %17 = math.rsqrt %16 : vector<1x128xf32>
    %c2 = arith.constant 2 : index
    %18 = memref.load %arg1[%c2] : memref<4xf32, #tpu.memory_space<smem>>
    %19 = vector.broadcast %18 : f32 to vector<1x128xf32>
    %20 = arith.cmpf ogt, %6, %19 : vector<1x128xf32>
    %c0_2 = arith.constant 0 : index
    %21 = memref.load %arg1[%c0_2] : memref<4xf32, #tpu.memory_space<smem>>
    %22 = vector.broadcast %21 : f32 to vector<1x128xf32>
    %23 = arith.mulf %22, %14 : vector<1x128xf32>
    %cst_3 = arith.constant 1.000000e+00 : f32
    %24 = vector.broadcast %cst_3 : f32 to vector<1x128xf32>
    %25 = arith.select %20, %23, %24 : vector<1x128xi1>, vector<1x128xf32>
    %c3 = arith.constant 3 : index
    %26 = memref.load %arg1[%c3] : memref<4xf32, #tpu.memory_space<smem>>
    %27 = vector.broadcast %26 : f32 to vector<1x128xf32>
    %28 = arith.cmpf ogt, %11, %27 : vector<1x128xf32>
    %c1 = arith.constant 1 : index
    %29 = memref.load %arg1[%c1] : memref<4xf32, #tpu.memory_space<smem>>
    %30 = vector.broadcast %29 : f32 to vector<1x128xf32>
    %31 = arith.mulf %30, %17 : vector<1x128xf32>
    %cst_4 = arith.constant 1.000000e+00 : f32
    %32 = vector.broadcast %cst_4 : f32 to vector<1x128xf32>
    %33 = arith.select %28, %31, %32 : vector<1x128xi1>, vector<1x128xf32>
    %34 = tpu.iota {dimensions = array<i32: 0>} : vector<6x128xi32>
    %c3_i32 = arith.constant 3 : i32
    %35 = vector.broadcast %c3_i32 : i32 to vector<6x128xi32>
    %36 = arith.cmpi slt, %34, %35 : vector<6x128xi32>
    %37 = vector.shape_cast %25 : vector<1x128xf32> to vector<1x128xf32>
    %38 = vector.broadcast %37 : vector<1x128xf32> to vector<6x128xf32>
    %39 = vector.shape_cast %33 : vector<1x128xf32> to vector<1x128xf32>
    %40 = vector.broadcast %39 : vector<1x128xf32> to vector<6x128xf32>
    %41 = arith.select %36, %38, %40 : vector<6x128xi1>, vector<6x128xf32>
    %42 = arith.mulf %0, %41 : vector<6x128xf32>
    %c0_5 = arith.constant 0 : index
    %c0_6 = arith.constant 0 : index
    %43 = vector.load %arg3[%c0_5, %c0_6] : memref<6x128xf32, #tpu.memory_space<vmem>>, vector<6x128xf32>
    tpu.vector_store %arg3[%c0_5, %c0_6], %42 {strides = array<i32>} : memref<6x128xf32, #tpu.memory_space<vmem>>, vector<6x128xf32>,
    return
  }
  func.func @transform_0(%arg0: i32) -> i32 {
    %c0_i32 = arith.constant 0 : i32
    %c0_i32_0 = arith.constant 0 : i32
    return %c0_i32 : i32
  }
  func.func @transform_1(%arg0: i32) -> (i32, i32) {
    %c0_i32 = arith.constant 0 : i32
    %c0_i32_0 = arith.constant 0 : i32
    return %c0_i32, %arg0 : i32, i32
  }
  func.func @transform_2(%arg0: i32) -> (i32, i32) {
    %c0_i32 = arith.constant 0 : i32
    %c0_i32_0 = arith.constant 0 : i32
    return %c0_i32, %arg0 : i32, i32
  }
}

</mosaic_0001>

<llo_original>
// kernel: tpu_custom_call.1
$region0: #{tpu_custom_call.1}
  #allocation0 [shape = 'u32[]', space=smem, size = 0x4, offset = 0x4, fixed_abs, tag = 'smem constant byte address 0x4 - core index']
  #allocation1 [shape = 'u32[144,128]{1,0:T(1,128)}', space=vmem, size = 0x12000, scoped, tag = 'internal scratch']
  %s0 = inlined_call_operand.hbm [shape: f32[4], index: 0, kind: input, shape index: {}]
  %s1 = inlined_call_operand.hbm [shape: f32[6,128], index: 1, kind: input, shape index: {}]
  %s2 = inlined_call_operand.hbm [shape: f32[6,128], index: 2, kind: output, shape index: {}]
  %s3 = sld [smem:[#allocation0]]
  $region26: #{tpu_custom_call.1} parent=0
    _
  %s5 = ssub.s32 1, %s3
  %s6 = scalar_select 0, %s5, %s3
  $region1: #{tpu_custom_call.1} parent=0
    #allocation2 [shape = 'u8[512]{0}', space=smem, size = 0x200, scoped, tag = 'input window, operand 0, single buffered']
    #allocation3 [shape = 's32[1]{0}', space=sflag, size = 0x4, scoped, tag = 'scoped memory for tpu_custom_call.1']
    #allocation4 [shape = 's32[1]{0}', space=sflag, size = 0x4, scoped, tag = 'scoped memory for tpu_custom_call.1']
    #allocation5 [shape = 's32[1]{0}', space=sflag, size = 0x4, scoped, tag = 'scoped memory for tpu_custom_call.1']
    #allocation6 [shape = 'u8[4096]{0}', space=vmem, size = 0x1000, scoped, tag = 'input window, operand 1, single buffered']
    #allocation7 [shape = 'u8[4096]{0}', space=vmem, size = 0x1000, scoped, tag = 'output window, operand 0, single buffered']
    %7 = vsyncpa [#allocation5], 0
    %8 = vsyncpa [#allocation3], 0
    %9 = vsyncpa [#allocation4], 0
    // Predicated region
    $region2: #{tpu_custom_call.1} parent=1 // pred_check
      _
    $region3: #{tpu_custom_call.1} parent=1 // pred_check_branch
      %11 = sbr.rel (0) target = $region5
    $region4: #{tpu_custom_call.1} parent=1 // pred_region
      %s13 = ssub.s32 16, 16
      %14 = vsyncadd [#allocation5], %s13
      %17 = dma.hbm_to_smem %s0, 16, [#allocation2], [#allocation5]
    $region5: #{tpu_custom_call.1} parent=1 // pred_fallthru
      _
    // Predicated region
    $region6: #{tpu_custom_call.1} parent=1 // pred_check
      _
    $region7: #{tpu_custom_call.1} parent=1 // pred_check_branch
      %19 = sbr.rel (0) target = $region9
    $region8: #{tpu_custom_call.1} parent=1 // pred_region
      %s21 = ssub.s32 128, 128
      %22 = vsyncadd [#allocation3], %s21
      %s24 = sshll.u32 [#allocation6], 4
      %s25 = int_to_ptr.vmem [resolvable:$true] %s24
      %27 = dma.hbm_to_vmem [thread:$0]  %s1, 128, %s25, [#allocation3]
    $region9: #{tpu_custom_call.1} parent=1 // pred_fallthru
      _
    // Predicated region
    $region10: #{tpu_custom_call.1} parent=1 // pred_check
      _
    $region11: #{tpu_custom_call.1} parent=1 // pred_check_branch
      %29 = sbr.rel (0) target = $region13
    $region12: #{tpu_custom_call.1} parent=1 // pred_region
      %30 = dma.done [#allocation5], 16
    $region13: #{tpu_custom_call.1} parent=1 // pred_fallthru
      _
    // Predicated region
    $region14: #{tpu_custom_call.1} parent=1 // pred_check
      _
    $region15: #{tpu_custom_call.1} parent=1 // pred_check_branch
      %32 = sbr.rel (0) target = $region17
    $region16: #{tpu_custom_call.1} parent=1 // pred_region
      %33 = dma.done [#allocation3], 128
    $region17: #{tpu_custom_call.1} parent=1 // pred_fallthru
      _
    %34 = sfence
    %v35 = vld [vmem:[#allocation6] sm:$0x3f]
    %v36 = vmul.f32 %v35, %v35
    %v38 = vrot.slane %v36, 1
    %v40 = vadd.f32 %v36, %v38
    %v41 = vrot.slane %v36, 2
    %v43 = vadd.f32 %v40, %v41
    %v44 = vmax.f32 %v43, 1e-30
    %v45 = vrsqrt.pop %v44
    %s46 = sld [smem:[#allocation2 + $0x2]]
    %v47 = vstv %s46
    %vm48 = vcmp.gt.f32.partialorder %v43, %v47
    %s49 = sld [smem:[#allocation2]]
    %v50 = vstv %s49
    %v51 = vmul.f32 %v50, %v45
    %v52 = vsel %vm48, %v51, 1.0
    %s53 = sld [smem:[#allocation2 + $0x3]]
    %v54 = vstv %s53
    %vm55 = vcmp.gt.f32.partialorder %v43, %v54
    %s56 = sld [smem:[#allocation2 + $0x1]]
    %v57 = vstv %s56
    %v58 = vmul.f32 %v57, %v45
    %v59 = vsel %vm55, %v58, 1.0
    %v60 = vlaneseq
    %v61 = vshrl.u32 %v60, 7
    %vm62 = vcmp.lt.s32.totalorder %v61, 3
    %v63 = vlaneseq
    %v64 = vshrl.u32 %v63, 7
    %v65 = vsub.s32 0, %v64
    %v66 = vrot.slane %v52, %v65
    %v67 = vlaneseq
    %v68 = vshrl.u32 %v67, 7
    %v69 = vsub.s32 3, %v68
    %v70 = vrot.slane %v59, %v69
    %v71 = vsel %vm62, %v66, %v70
    %v72 = vmul.f32 %v35, %v71
    %73 = vst [vmem:[#allocation7] sm:$0x3f] %v72
    // Predicated region
    $region18: #{tpu_custom_call.1} parent=1 // pred_check
      _
    $region19: #{tpu_custom_call.1} parent=1 // pred_check_branch
      %75 = sbr.rel (0) target = $region21
    $region20: #{tpu_custom_call.1} parent=1 // pred_region
      %s77 = ssub.s32 128, 128
      %78 = vsyncadd [#allocation4], %s77
      %s80 = sshll.u32 [#allocation7], 4
      %s81 = int_to_ptr.vmem [resolvable:$true] %s80
      %83 = dma.vmem_to_hbm [thread:$0]  %s81, 128, %s2, [#allocation4]
    $region21: #{tpu_custom_call.1} parent=1 // pred_fallthru
      _
    // Predicated region
    $region22: #{tpu_custom_call.1} parent=1 // pred_check
      _
    $region23: #{tpu_custom_call.1} parent=1 // pred_check_branch
      %85 = sbr.rel (0) target = $region25
    $region24: #{tpu_custom_call.1} parent=1 // pred_region
      %86 = dma.done [#allocation4], 128
    $region25: #{tpu_custom_call.1} parent=1 // pred_fallthru
      _
    %87 = vsyncpa [#allocation3], 1
    %88 = vsyncpa [#allocation4], 1
    %89 = vsyncpa [#allocation5], 1

</llo_original>
